<compile_context>
chip_gen: v7x
topology: tpu7x:2x2x1
jax: 0.10.0
libtpu: 0.0.40
codegen_flags: <defaults>
</compile_context>

<pallas_src>
import numpy as np
import jax
import jax.numpy as jnp
from jax.experimental import pallas as pl
from jax.experimental.pallas import tpu as pltpu


# ----------------------------------------------------------------------------
# Kernels
# ----------------------------------------------------------------------------
def _affine(x_ref, params_ref):
    """u = x * exp(log_scale) + shift. params_ref row 0 = scale, row 1 = shift."""
    x = x_ref[...].astype(jnp.float32)              # (tb, W)
    p = params_ref[...].astype(jnp.float32)         # (2, W) resident (const index_map)
    return x * p[0:1, :] + p[1:2, :]


def _segment_sums(u2, seg):
    """Per-original-row sum of u^2 when g rows are folded into the lane dim.

    seg is a (W, g) block-diagonal ones matrix, so this is a segment-sum on the
    otherwise-idle MXU.  u2 is split into a bf16-exact high part plus a small
    residual so the result is ~f32-exact even if the matmul runs as a single
    bf16 pass (MXU always accumulates in f32)."""
    hi = u2.astype(jnp.bfloat16).astype(jnp.float32)
    lo = u2 - hi
    return (jnp.dot(hi, seg, preferred_element_type=jnp.float32)
            + jnp.dot(lo, seg, preferred_element_type=jnp.float32))


def _loglik(u, bias_ref, seg=None):
    """bias - 0.5 * per-row sum(u^2); bias = -0.5*D*log(2pi) + sum(log_scale)."""
    u2 = u * u
    if seg is None:
        s = jnp.sum(u2, axis=1, keepdims=True)       # (tb, 1) lane reduce (XLU)
    else:
        s = _segment_sums(u2, seg)                   # (tb, g) on the MXU
    return bias_ref[0] - 0.5 * s


def _kernel_u(bias_ref, x_ref, params_ref, u_ref, ll_ref):
    u = _affine(x_ref, params_ref)
    u_ref[...] = u.astype(u_ref.dtype)
    ll_ref[...] = _loglik(u, bias_ref).astype(ll_ref.dtype)


def _kernel_ll(bias_ref, x_ref, params_ref, ll_ref):
    u = _affine(x_ref, params_ref)
    ll_ref[...] = _loglik(u, bias_ref).astype(ll_ref.dtype)


def _kernel_u_folded(bias_ref, x_ref, params_ref, seg_ref, u_ref, ll_ref):
    u = _affine(x_ref, params_ref)
    u_ref[...] = u.astype(u_ref.dtype)
    ll_ref[...] = _loglik(u, bias_ref, seg_ref[...]).astype(ll_ref.dtype)


def _kernel_ll_folded(bias_ref, x_ref, params_ref, seg_ref, ll_ref):
    u = _affine(x_ref, params_ref)
    ll_ref[...] = _loglik(u, bias_ref, seg_ref[...]).astype(ll_ref.dtype)


# ----------------------------------------------------------------------------
# Wrapper helpers
# ----------------------------------------------------------------------------
def _round_up(a, m):
    return ((a + m - 1) // m) * m


def _sublane(dtype):
    # f32 -> 8, bf16 -> 16, int8/fp8 -> 32 (u is written back in x's dtype).
    return max(8, 32 // jnp.dtype(dtype).itemsize)


def _x_block_target_bytes():
    """Per-generation x-block target. Misdetection only changes a perf knob."""
    try:
        kind = jax.devices()[0].device_kind.lower()
    except Exception:
        return 4 << 20
    if "v5 lite" in kind or "v5e" in kind or "v5litepod" in kind:
        return 2 << 20          # ~0.8 TB/s HBM: 2 MiB already at roofline
    if "7" in kind:
        return 8 << 20          # ~3.2 TB/s HBM: need bigger tiles vs step overhead
    return 4 << 20              # v6e default


def _choose_rows(n_rows, row_bytes, sublane, target_bytes):
    """Rows per tile: ~target_bytes of x per block, a multiple of the dtype
    sublane, and capped so the grid keeps >=2 steps whenever possible (so
    ("parallel",) can shard across v7x's two TensorCores)."""
    target = max(sublane, (target_bytes // max(1, row_bytes)) // sublane * sublane)
    half = _round_up(max(1, (n_rows + 1) // 2), sublane)
    target = min(target, half)
    return n_rows if target >= n_rows else target


# ----------------------------------------------------------------------------
# Main entry
# ----------------------------------------------------------------------------
def _base_flow_call(x, log_scale, shift, *, return_u):
    B, D = x.shape
    x_dt = x.dtype
    itemsize = jnp.dtype(x_dt).itemsize
    sub = _sublane(x_dt)
    f32 = jnp.float32

    # --- block-invariant work, hoisted (done once, not per grid step) --------
    scale = jnp.exp(log_scale.astype(f32))                      # (D,)
    shift32 = shift.astype(f32)                                 # (D,)
    bias = (jnp.float32(-0.5 * D * np.log(2.0 * np.pi))
            + jnp.sum(log_scale.astype(f32))).reshape(1)        # SMEM prefetch

    # --- lane-dense fold: g batch rows -> lane dim when D < 128 --------------
    g = max(1, 128 // D) if D < 128 else 1
    folded = (g > 1) and (B % g == 0) and (B // g >= sub)
    if folded:
        W = g * D
        n_rows = B // g
        xk = x.reshape(n_rows, W)                               # row-major bitcast
        params = jnp.stack([jnp.tile(scale, g), jnp.tile(shift32, g)])   # (2, W)
        seg_np = np.zeros((W, g), dtype=np.float32)             # block-diag ones
        for j in range(g):
            seg_np[j * D:(j + 1) * D, j] = 1.0
        seg = jnp.asarray(seg_np)
        ll_cols = g
    else:
        W = D
        n_rows = B
        xk = x
        params = jnp.stack([scale, shift32])                    # (2, D)
        seg = None
        ll_cols = 1

    # --- batch tiling (no padding; ragged last tile handled by Pallas) -------
    row_bytes = W * itemsize
    tb = _choose_rows(n_rows, row_bytes, sub, _x_block_target_bytes())
    grid = (pl.cdiv(n_rows, tb),)

    # index_maps receive the scalar-prefetch ref as a trailing positional arg.
    x_spec = pl.BlockSpec((tb, W), lambda i, _b: (i, 0))
    param_spec = pl.BlockSpec((2, W), lambda i, _b: (0, 0))     # DMA'd once, resident
    ll_spec = pl.BlockSpec((tb, ll_cols), lambda i, _b: (i, 0))

    in_specs = [x_spec, param_spec]
    args = [bias, xk, params]
    if folded:
        in_specs.append(pl.BlockSpec((W, g), lambda i, _b: (0, 0)))   # resident
        args.append(seg)

    ll_shape = jax.ShapeDtypeStruct((n_rows, ll_cols), jnp.float32)
    if return_u:
        kernel = _kernel_u_folded if folded else _kernel_u
        out_shape = (jax.ShapeDtypeStruct((n_rows, W), x_dt), ll_shape)
        out_specs = (x_spec, ll_spec)
    else:
        kernel = _kernel_ll_folded if folded else _kernel_ll
        out_shape = ll_shape
        out_specs = ll_spec

    # --- VMEM budget & cost estimate -----------------------------------------
    x_blk = tb * W * itemsize
    io_blk = x_blk * (2 if return_u else 1) + tb * ll_cols * 4
    resident = 2 * W * 4 + (W * g * 4 if folded else 0) + 4
    need = 2 * io_blk + 2 * resident          # double-buffered pipeline buffers
    vmem_limit = int(min(max(need + (4 << 20), 32 << 20), 48 << 20))

    bytes_accessed = (n_rows * W * itemsize * (2 if return_u else 1)
                      + n_rows * ll_cols * 4 + params.size * 4
                      + (seg.size * 4 if folded else 0) + 4)
    flops = int(n_rows * W * (4 + (2 * g if folded else 0)))

    outs = pl.pallas_call(
        kernel,
        out_shape=out_shape,
        grid_spec=pltpu.PrefetchScalarGridSpec(
            num_scalar_prefetch=1,
            grid=grid,
            in_specs=in_specs,
            out_specs=out_specs,
        ),
        compiler_params=pltpu.CompilerParams(
            # batch tiles are independent -> shard across v7x's 2 TensorCores.
            dimension_semantics=("parallel",),
            vmem_limit_bytes=vmem_limit,
        ),
        cost_estimate=pl.CostEstimate(
            flops=flops,
            transcendentals=0,               # exp() hoisted to the wrapper
            bytes_accessed=int(bytes_accessed),
        ),
    )(*args)

    if return_u:
        u, ll = outs
        # Both reshapes are row-major bitcasts (no HBM copy).
        return u.reshape(B, D), ll.reshape(B)
    return None, outs.reshape(B)


def base_flow_log_likelihood(x, log_scale, shift):
    """Mirrors BaseFlow.log_likelihood: returns (u, log p(x))."""
    return _base_flow_call(x, log_scale, shift, return_u=True)


def base_flow_log_likelihood_only(x, log_scale, shift):
    """log p(x) only -- skips the u writeback (half the HBM traffic)."""
    _, ll = _base_flow_call(x, log_scale, shift, return_u=False)
    return ll


def base_flow_log_likelihood_and_score(x, log_scale, shift):
    """Mirrors BaseFlow.log_likelihood_and_score (score is None)."""
    u, ll = base_flow_log_likelihood(x, log_scale, shift)
    return u, ll, None


# TODO(synk): BaseFlow.forward / generate_samples are @abstractmethod in the
# reference module; only the Gaussian log-likelihood hot path has concrete math.


# ----------------------------------------------------------------------------
# Demo / correctness checks
# ----------------------------------------------------------------------------
if __name__ == "__main__":
    def _reference(x, log_scale, shift):
        D = x.shape[1]
        u = x.astype(jnp.float32) * jnp.exp(log_scale)[None, :] + shift[None, :]
        const = float(-0.5 * D * np.log(2.0 * np.pi))
        ll = const - 0.5 * jnp.sum(u ** 2, axis=1) + jnp.sum(log_scale)
        return u, ll

    key = jax.random.PRNGKey(0)
    kx, ks, kb, k2, k3, k4 = jax.random.split(key, 6)

    D = 32
    log_scale = 0.1 * jax.random.normal(ks, (D,), dtype=jnp.float32)
    shift = 0.05 * jax.random.normal(kb, (D,), dtype=jnp.float32)

    # (1) small batch -> un-folded path, single tile; also ll-only and score.
    x = jax.random.normal(kx, (8, D), dtype=jnp.float32)
    u, ll, score = base_flow_log_likelihood_and_score(x, log_scale, shift)
    ll_only = base_flow_log_likelihood_only(x, log_scale, shift)
    jax.block_until_ready((u, ll, ll_only))
    u_r, ll_r = _reference(x, log_scale, shift)
    np.testing.assert_allclose(np.asarray(u), np.asarray(u_r), rtol=1e-5, atol=1e-5)
    np.testing.assert_allclose(np.asarray(ll), np.asarray(ll_r), rtol=1e-5, atol=1e-5)
    np.testing.assert_allclose(np.asarray(ll_only), np.asarray(ll_r), rtol=1e-5, atol=1e-5)
    assert score is None

    # (2) B=13: not divisible by the fold factor -> un-folded path, and the
    #     grid has a ragged last tile (no jnp.pad anywhere).
    x2 = jax.random.normal(k2, (13, D), dtype=jnp.float32)
    u2, ll2 = base_flow_log_likelihood(x2, log_scale, shift)
    jax.block_until_ready((u2, ll2))
    u2_r, ll2_r = _reference(x2, log_scale, shift)
    np.testing.assert_allclose(np.asarray(u2), np.asarray(u2_r), rtol=1e-5, atol=1e-5)
    np.testing.assert_allclose(np.asarray(ll2), np.asarray(ll2_r), rtol=1e-5, atol=1e-5)

    # (3) folded path (4 rows per 128-lane vreg), >=2 grid tiles, ragged last tile.
    x3 = jax.random.normal(k3, (1000, D), dtype=jnp.float32)
    u3, ll3 = base_flow_log_likelihood(x3, log_scale, shift)
    ll3_only = base_flow_log_likelihood_only(x3, log_scale, shift)
    jax.block_until_ready((u3, ll3, ll3_only))
    u3_r, ll3_r = _reference(x3, log_scale, shift)
    np.testing.assert_allclose(np.asarray(u3), np.asarray(u3_r), rtol=1e-5, atol=1e-5)
    np.testing.assert_allclose(np.asarray(ll3), np.asarray(ll3_r), rtol=1e-4, atol=2e-4)
    np.testing.assert_allclose(np.asarray(ll3_only), np.asarray(ll3_r), rtol=1e-4, atol=2e-4)

    # (4) bf16 input: exercises the dtype-aware sublane multiple (16 for bf16)
    #     plus the folded path with two even tiles.
    x4 = jax.random.normal(k4, (512, D), dtype=jnp.float32).astype(jnp.bfloat16)
    u4, ll4 = base_flow_log_likelihood(x4, log_scale, shift)
    jax.block_until_ready((u4, ll4))
    u4_r, ll4_r = _reference(x4.astype(jnp.float32), log_scale, shift)
    np.testing.assert_allclose(np.asarray(u4.astype(jnp.float32)), np.asarray(u4_r),
                               rtol=2e-2, atol=2e-2)
    np.testing.assert_allclose(np.asarray(ll4), np.asarray(ll4_r), rtol=1e-4, atol=2e-4)

    print("KERNEL_OK")
</pallas_src>

<mosaic_0001>
module attributes {stable_mosaic.version = 11 : i64} {
  func.func @_kernel_u(%arg0: i32, %arg1: memref<1xf32, #tpu.memory_space<smem>>, %arg2: memref<8x32xf32, #tpu.memory_space<vmem>>, %arg3: memref<2x32xf32, #tpu.memory_space<vmem>>, %arg4: memref<8x32xf32, #tpu.memory_space<vmem>>, %arg5: memref<8x1xf32, #tpu.memory_space<vmem>>) attributes {dimension_semantics = [#tpu.dimension_semantics<parallel>], iteration_bounds = array<i64: 1>, scalar_prefetch = 1 : i64, scratch_operands = 0 : i64, tpu.core_type = #tpu.core_type<tc>, window_params = [{transform_indices = @transform_0, window_bounds = array<i64: 8, 32>}, {pipeline_mode = #tpu.pipeline_mode<synchronous>, transform_indices = @transform_1, window_bounds = array<i64: 2, 32>}, {transform_indices = @transform_2, window_bounds = array<i64: 8, 32>}, {transform_indices = @transform_3, window_bounds = array<i64: 8, 1>}]} {
    %c0 = arith.constant 0 : index
    %c0_0 = arith.constant 0 : index
    %0 = vector.load %arg2[%c0, %c0_0] : memref<8x32xf32, #tpu.memory_space<vmem>>, vector<8x32xf32>
    %c0_1 = arith.constant 0 : index
    %c0_2 = arith.constant 0 : index
    %1 = vector.load %arg3[%c0_1, %c0_2] : memref<2x32xf32, #tpu.memory_space<vmem>>, vector<2x32xf32>
    %2 = vector.extract_strided_slice %1 {offsets = [0, 0], sizes = [1, 32], strides = [1, 1]} : vector<2x32xf32> to vector<1x32xf32>
    %3 = vector.broadcast %2 : vector<1x32xf32> to vector<8x32xf32>
    %4 = arith.mulf %0, %3 : vector<8x32xf32>
    %5 = vector.extract_strided_slice %1 {offsets = [1, 0], sizes = [1, 32], strides = [1, 1]} : vector<2x32xf32> to vector<1x32xf32>
    %6 = vector.broadcast %5 : vector<1x32xf32> to vector<8x32xf32>
    %7 = arith.addf %4, %6 : vector<8x32xf32>
    %c0_3 = arith.constant 0 : index
    %c0_4 = arith.constant 0 : index
    %8 = vector.load %arg4[%c0_3, %c0_4] : memref<8x32xf32, #tpu.memory_space<vmem>>, vector<8x32xf32>
    tpu.vector_store %arg4[%c0_3, %c0_4], %7 {strides = array<i32>} : memref<8x32xf32, #tpu.memory_space<vmem>>, vector<8x32xf32>,
    %9 = arith.mulf %7, %7 : vector<8x32xf32>
    %cst = arith.constant dense<0.000000e+00> : vector<8xf32>
    %10 = vector.multi_reduction <add>, %9, %cst [1] : vector<8x32xf32> to vector<8xf32>
    %11 = vector.shape_cast %10 : vector<8xf32> to vector<8x1xf32>
    %c0_5 = arith.constant 0 : index
    %12 = memref.load %arg1[%c0_5] : memref<1xf32, #tpu.memory_space<smem>>
    %cst_6 = arith.constant 5.000000e-01 : f32
    %13 = vector.broadcast %cst_6 : f32 to vector<8x1xf32>
    %14 = arith.mulf %13, %11 : vector<8x1xf32>
    %15 = vector.broadcast %12 : f32 to vector<8x1xf32>
    %16 = arith.subf %15, %14 : vector<8x1xf32>
    %c0_7 = arith.constant 0 : index
    %c0_8 = arith.constant 0 : index
    %17 = vector.load %arg5[%c0_7, %c0_8] : memref<8x1xf32, #tpu.memory_space<vmem>>, vector<8x1xf32>
    tpu.vector_store %arg5[%c0_7, %c0_8], %16 {strides = array<i32>} : memref<8x1xf32, #tpu.memory_space<vmem>>, vector<8x1xf32>,
    return
  }
  func.func @transform_0(%arg0: i32, %arg1: memref<1xf32, #tpu.memory_space<smem>>) -> (i32, i32) {
    %c0_i32 = arith.constant 0 : i32
    %c0_i32_0 = arith.constant 0 : i32
    return %arg0, %c0_i32 : i32, i32
  }
  func.func @transform_1(%arg0: i32, %arg1: memref<1xf32, #tpu.memory_space<smem>>) -> (i32, i32) {
    %c0_i32 = arith.constant 0 : i32
    %c0_i32_0 = arith.constant 0 : i32
    %c0_i32_1 = arith.constant 0 : i32
    return %c0_i32, %c0_i32_0 : i32, i32
  }
  func.func @transform_2(%arg0: i32, %arg1: memref<1xf32, #tpu.memory_space<smem>>) -> (i32, i32) {
    %c0_i32 = arith.constant 0 : i32
    %c0_i32_0 = arith.constant 0 : i32
    return %arg0, %c0_i32 : i32, i32
  }
  func.func @transform_3(%arg0: i32, %arg1: memref<1xf32, #tpu.memory_space<smem>>) -> (i32, i32) {
    %c0_i32 = arith.constant 0 : i32
    %c0_i32_0 = arith.constant 0 : i32
    return %arg0, %c0_i32 : i32, i32
  }
}

</mosaic_0001>

<llo_original>
// kernel: tpu_custom_call.1
$region0: #{tpu_custom_call.1}
  #allocation0 [shape = 'u32[]', space=smem, size = 0x4, offset = 0x4, fixed_abs, tag = 'smem constant byte address 0x4 - core index']
  #allocation1 [shape = 'u32[144,128]{1,0:T(1,128)}', space=vmem, size = 0x12000, scoped, tag = 'internal scratch']
  #allocation2 [shape = 's32[1]{0}', space=sflag, size = 0x4, scoped, tag = 'scoped memory for tpu_custom_call.1']
  #allocation3 [shape = 'f32[1]{0:T(128)S(6)}', space=smem, size = 0x200, scoped, tag = 'prefetched SMEM operand 0']
  %s0 = inlined_call_operand.<no memory space> [shape: f32[1], index: 0, kind: input, shape index: {}]
  %s1 = inlined_call_operand.hbm [shape: f32[8,32], index: 1, kind: input, shape index: {}]
  %s2 = inlined_call_operand.vmem [shape: f32[2,32], index: 2, kind: input, shape index: {}]
  %s3 = inlined_call_operand.hbm [shape: f32[8,32], index: 3, kind: output, shape index: {0}]
  %s4 = inlined_call_operand.vmem [shape: f32[8,1], index: 4, kind: output, shape index: {1}]
  %5 = xla_tuple %s3, %s4
  %s6 = sld [smem:[#allocation0]]
  $region30: #{tpu_custom_call.1} parent=0
    _
  %s8 = ssub.s32 1, %s6
  %s9 = scalar_select 0, %s8, %s6
  %10 = sst [smem:[#allocation3]] %s0
  $region1: #{tpu_custom_call.1} parent=0
    #allocation4 [shape = 'u8[4096]{0}', space=vmem, size = 0x1000, scoped, tag = 'input window, operand 1, single buffered']
    #allocation5 [shape = 's32[1]{0}', space=sflag, size = 0x4, scoped, tag = 'scoped memory for tpu_custom_call.1']
    #allocation6 [shape = 's32[1]{0}', space=sflag, size = 0x4, scoped, tag = 'scoped memory for tpu_custom_call.1']
    #allocation7 [shape = 'u8[4096]{0}', space=vmem, size = 0x1000, scoped, tag = 'output window, operand 0, single buffered']
    %11 = vsyncpa [#allocation5], 0
    %12 = vsyncpa [#allocation6], 0
    // Predicated region
    $region2: #{tpu_custom_call.1} parent=1 // pred_check
      _
    $region3: #{tpu_custom_call.1} parent=1 // pred_check_branch
      %14 = sbr.rel (0) target = $region5
    $region4: #{tpu_custom_call.1} parent=1 // pred_region
      %s16 = ssub.s32 128, 128
      %17 = vsyncadd [#allocation5], %s16
      %s19 = sshll.u32 [#allocation4], 4
      %s20 = int_to_ptr.vmem [resolvable:$true] %s19
      %22 = dma.hbm_to_vmem [thread:$0]  %s1, 128, %s20, [#allocation5]
    $region5: #{tpu_custom_call.1} parent=1 // pred_fallthru
      _
    // Predicated region
    $region6: #{tpu_custom_call.1} parent=1 // pred_check
      _
    $region7: #{tpu_custom_call.1} parent=1 // pred_check_branch
      %24 = sbr.rel (0) target = $region9
    $region8: #{tpu_custom_call.1} parent=1 // pred_region
      _
    $region9: #{tpu_custom_call.1} parent=1 // pred_fallthru
      _
    // Predicated region
    $region10: #{tpu_custom_call.1} parent=1 // pred_check
      _
    $region11: #{tpu_custom_call.1} parent=1 // pred_check_branch
      %26 = sbr.rel (0) target = $region13
    $region12: #{tpu_custom_call.1} parent=1 // pred_region
      %27 = dma.done [#allocation5], 128
    $region13: #{tpu_custom_call.1} parent=1 // pred_fallthru
      _
    %v28 = vld [vmem:[#allocation4] sm:$0xff]
    %v29 = vld [vmem:[%s2] sm:$0x3]
    %v30 = vlaneseq
    %v31 = vshrl.u32 %v30, 7
    %v32 = vsub.s32 0, %v31
    %v33 = vrot.slane %v29, %v32
    %v34 = vmul.f32 %v28, %v33
    %v35 = vlaneseq
    %v36 = vshrl.u32 %v35, 7
    %v37 = vsub.s32 1, %v36
    %v38 = vrot.slane %v29, %v37
    %v39 = vadd.f32 %v34, %v38
    %vm40 = vcmask 261120
    %41 = vst.msk [vmem:[#allocation7] sm:$0xff] %vm40, %v39
    %v42 = vmul.f32 %v39, %v39
    %v43 = vsel %vm40, %v42, 0.0
    %44 = vadd.xlane.f32.xlu0 %v43
    %v45 = vpop.xlane.xlu0 %44
    %s46 = sld [smem:[#allocation3]]
    %v47 = vmul.f32 %v45, 0.5
    %v48 = vstv %s46
    %v49 = vsub.f32 %v48, %v47
    %vm50 = vcmask 7168
    %51 = vst.msk [vmem:[%s4] sm:$0xff] %vm50, %v49
    // Predicated region
    $region14: #{tpu_custom_call.1} parent=1 // pred_check
      _
    $region15: #{tpu_custom_call.1} parent=1 // pred_check_branch
      %53 = sbr.rel (0) target = $region17
    $region16: #{tpu_custom_call.1} parent=1 // pred_region
      %s55 = ssub.s32 128, 128
      %56 = vsyncadd [#allocation6], %s55
      %s58 = sshll.u32 [#allocation7], 4
      %s59 = int_to_ptr.vmem [resolvable:$true] %s58
      %61 = dma.vmem_to_hbm [thread:$0]  %s59, 128, %s3, [#allocation6]
    $region17: #{tpu_custom_call.1} parent=1 // pred_fallthru
      _
    // Predicated region
    $region18: #{tpu_custom_call.1} parent=1 // pred_check
      _
    $region19: #{tpu_custom_call.1} parent=1 // pred_check_branch
      %63 = sbr.rel (0) target = $region21
    $region20: #{tpu_custom_call.1} parent=1 // pred_region
      _
    $region21: #{tpu_custom_call.1} parent=1 // pred_fallthru
      _
    // Predicated region
    $region22: #{tpu_custom_call.1} parent=1 // pred_check
      _
    $region23: #{tpu_custom_call.1} parent=1 // pred_check_branch
      %65 = sbr.rel (0) target = $region25
    $region24: #{tpu_custom_call.1} parent=1 // pred_region
      %66 = dma.done [#allocation6], 128
    $region25: #{tpu_custom_call.1} parent=1 // pred_fallthru
      _
    // Predicated region
    $region26: #{tpu_custom_call.1} parent=1 // pred_check
      _
    $region27: #{tpu_custom_call.1} parent=1 // pred_check_branch
      %68 = sbr.rel (0) target = $region29
    $region28: #{tpu_custom_call.1} parent=1 // pred_region
      _
    $region29: #{tpu_custom_call.1} parent=1 // pred_fallthru
      _
    %69 = vsyncpa [#allocation5], 1
    %70 = vsyncpa [#allocation6], 1

</llo_original>
